<compile_context>
chip_gen: v7x
topology: tpu7x:2x2x1
jax: 0.10.0
libtpu: 0.0.40
codegen_flags: <defaults>
</compile_context>

<pallas_src>
import math
import functools

import jax
import jax.numpy as jnp
from jax.experimental import pallas as pl
from jax.experimental.pallas import tpu as pltpu

_INV_SQRT2 = 1.0 / math.sqrt(2.0)


def _cap_head_kernel(x_ref, w1_ref, b1_ref, w2_ref, wd_ref, bd_ref,
                     wdec_ref, bdec_ref, out_ref):
    t = out_ref.shape[-1]                 # TILE_B (batch lanes handled this step)
    x = x_ref[...]                        # [H, 2T]: cols [:t] = poi CLS, [t:] = img CLS

    # ---- AttnPool.l1 + tanh, fused over both tokens (one MXU pass of w1) --------
    h1 = jnp.tanh(
        jnp.dot(w1_ref[...], x, preferred_element_type=jnp.float32) + b1_ref[...])
    # ---- AttnPool.l2 (A -> 1, no bias): VPU multiply + cross-sublane reduce -----
    s = jnp.sum(h1 * w2_ref[...], axis=0, keepdims=True)        # [1, 2T] lane-dense

    # ---- softmax over the 2 tokens: softmax([a, b])[0] == sigmoid(a - b) --------
    beta_poi = jax.nn.sigmoid(s[:, :t] - s[:, t:])               # [1, T]
    beta_img = 1.0 - beta_poi

    agg = beta_poi * x[:, :t] + beta_img * x[:, t:]              # [H, T]

    # ---- CommercialActivenessPredictionHead -------------------------------------
    h = jnp.dot(wd_ref[...], agg, preferred_element_type=jnp.float32) + bd_ref[...]
    h = 0.5 * h * (1.0 + jax.lax.erf(h * _INV_SQRT2))            # exact (erf) GELU
    # TODO(synk): nn.Dropout(config['fdrop']) is identity at inference; not applied.
    logit = jnp.sum(h * wdec_ref[...], axis=0, keepdims=True) + bdec_ref[...]
    out_ref[...] = logit                                         # [1, T] lane-dense


def init_params(key, hidden_size, attn_hidden=32, initializer_range=0.02):
    """Parameters in kernel-native (column-activation) layout.

    PyTorch mapping:
      w1   <- AttnPool.l1.weight       [A, H]        b1 <- l1.bias  ([A] -> [A, 1])
      w2   <- AttnPool.l2.weight.T     [A, 1]  (l2 has no bias)
      wd   <- head.dense.weight        [H, H]        bd <- dense.bias ([H] -> [H, 1])
      wdec <- head.decoder.weight.T    [H, 1]        bdec <- decoder.bias ([1] -> [1, 1])
    """
    k1, k2, k3, k4 = jax.random.split(key, 4)
    std = initializer_range
    return {
        "w1": (std * jax.random.normal(k1, (attn_hidden, hidden_size))).astype(jnp.float32),
        "b1": jnp.zeros((attn_hidden, 1), jnp.float32),
        "w2": (std * jax.random.normal(k2, (attn_hidden, 1))).astype(jnp.float32),
        "wd": (std * jax.random.normal(k3, (hidden_size, hidden_size))).astype(jnp.float32),
        "bd": jnp.zeros((hidden_size, 1), jnp.float32),
        "wdec": (std * jax.random.normal(k4, (hidden_size, 1))).astype(jnp.float32),
        "bdec": jnp.zeros((1, 1), jnp.float32),
    }


def commercial_activeness_head(encoder_output, params, *, seq_len_img, tile_b=128):
    """agg='attn' head of FinetuneCommercialActivenessPrediction.

    encoder_output: [B, N, H] float32 (stand-in for the ReFound encoder output).
    Returns raw prediction scores [B, 1] float32 (no output activation, as in PyTorch).
    """
    B, N, H = encoder_output.shape
    A = params["w1"].shape[0]

    cls_poi = encoder_output[:, 0, :]                 # [B, H]
    cls_img = encoder_output[:, N - seq_len_img, :]   # [B, H]

    nb = pl.cdiv(B, tile_b)
    b_pad = nb * tile_b
    pad = b_pad - B
    poi_t = jnp.pad(cls_poi, ((0, pad), (0, 0))).T    # [H, B_pad], batch on lanes
    img_t = jnp.pad(cls_img, ((0, pad), (0, 0))).T
    # Pack so each grid block sees its poi columns then its img columns contiguously:
    # [H, nb, 2, tile_b] -> [H, 2*B_pad].  (Wrapper-side layout plumbing only.)
    x = jnp.stack([poi_t.reshape(H, nb, tile_b),
                   img_t.reshape(H, nb, tile_b)], axis=2).reshape(H, 2 * b_pad)

    flops = int(2 * A * H * 2 * b_pad + 2 * H * H * b_pad
                + 4 * A * b_pad + 4 * H * b_pad)
    transcendentals = int(2 * A * b_pad + b_pad + H * b_pad)
    bytes_accessed = int(4 * (2 * b_pad * H + A * H + 2 * A
                              + H * H + 2 * H + 1 + b_pad))

    def wspec(shape):
        return pl.BlockSpec(shape, lambda i: (0, 0))   # VMEM-resident across the grid

    out = pl.pallas_call(
        _cap_head_kernel,
        out_shape=jax.ShapeDtypeStruct((1, b_pad), jnp.float32),
        grid=(nb,),
        in_specs=[
            pl.BlockSpec((H, 2 * tile_b), lambda i: (0, i)),   # packed CLS slab
            wspec((A, H)),    # w1
            wspec((A, 1)),    # b1
            wspec((A, 1)),    # w2 (column)
            wspec((H, H)),    # wd
            wspec((H, 1)),    # bd
            wspec((H, 1)),    # wdec (column)
            wspec((1, 1)),    # bdec
        ],
        out_specs=pl.BlockSpec((1, tile_b), lambda i: (0, i)),
        compiler_params=pltpu.CompilerParams(
            dimension_semantics=("parallel",)),
        cost_estimate=pl.CostEstimate(
            flops=flops, transcendentals=transcendentals,
            bytes_accessed=bytes_accessed),
        # NOTE: for realistic H (>= 768) store wd in bf16 and set vmem_limit_bytes
        # with v7x's 64 MiB budget in mind; unnecessary at this size.
    )(x, params["w1"], params["b1"], params["w2"],
      params["wd"], params["bd"], params["wdec"], params["bdec"])

    return out[0, :B].reshape(B, 1)


if __name__ == "__main__":
    B, N, H = 8, 6, 32        # batch, encoder tokens, hidden_size
    seq_len_img = 3           # img CLS token sits at index N - seq_len_img = 3
    key = jax.random.PRNGKey(0)
    k_emb, k_par = jax.random.split(key)

    # TODO(synk): the ReFound encoder (POIEmbed/SateEmbed/ModalEmbed + MoGE
    # transformer) is not translated; use a random stand-in for its output.
    encoder_output = jax.random.normal(k_emb, (B, N, H), dtype=jnp.float32)
    params = init_params(k_par, hidden_size=H, attn_hidden=32,
                         initializer_range=0.02)

    fwd = jax.jit(functools.partial(commercial_activeness_head,
                                    seq_len_img=seq_len_img))
    scores = fwd(encoder_output, params)
    jax.block_until_ready(scores)

    assert scores.shape == (B, 1), scores.shape
    assert bool(jnp.all(jnp.isfinite(scores)))
    print("KERNEL_OK")
</pallas_src>

<mosaic_0001>
module attributes {stable_mosaic.version = 11 : i64} {
  func.func @_cap_head_kernel(%arg0: i32, %arg1: memref<32x256xf32, #tpu.memory_space<vmem>>, %arg2: memref<32x32xf32, #tpu.memory_space<vmem>>, %arg3: memref<32x1xf32, #tpu.memory_space<vmem>>, %arg4: memref<32x1xf32, #tpu.memory_space<vmem>>, %arg5: memref<32x32xf32, #tpu.memory_space<vmem>>, %arg6: memref<32x1xf32, #tpu.memory_space<vmem>>, %arg7: memref<32x1xf32, #tpu.memory_space<vmem>>, %arg8: memref<1x1xf32, #tpu.memory_space<vmem>>, %arg9: memref<1x128xf32, #tpu.memory_space<vmem>>) attributes {dimension_semantics = [#tpu.dimension_semantics<parallel>], iteration_bounds = array<i64: 1>, scalar_prefetch = 0 : i64, scratch_operands = 0 : i64, tpu.core_type = #tpu.core_type<tc>, window_params = [{transform_indices = @transform_0, window_bounds = array<i64: 32, 256>}, {pipeline_mode = #tpu.pipeline_mode<synchronous>, transform_indices = @transform_1, window_bounds = array<i64: 32, 32>}, {pipeline_mode = #tpu.pipeline_mode<synchronous>, transform_indices = @transform_2, window_bounds = array<i64: 32, 1>}, {pipeline_mode = #tpu.pipeline_mode<synchronous>, transform_indices = @transform_3, window_bounds = array<i64: 32, 1>}, {pipeline_mode = #tpu.pipeline_mode<synchronous>, transform_indices = @transform_4, window_bounds = array<i64: 32, 32>}, {pipeline_mode = #tpu.pipeline_mode<synchronous>, transform_indices = @transform_5, window_bounds = array<i64: 32, 1>}, {pipeline_mode = #tpu.pipeline_mode<synchronous>, transform_indices = @transform_6, window_bounds = array<i64: 32, 1>}, {pipeline_mode = #tpu.pipeline_mode<synchronous>, transform_indices = @transform_7, window_bounds = array<i64: 1, 1>}, {transform_indices = @transform_8, window_bounds = array<i64: 1, 128>}]} {
    %c0 = arith.constant 0 : index
    %c0_0 = arith.constant 0 : index
    %0 = vector.load %arg1[%c0, %c0_0] : memref<32x256xf32, #tpu.memory_space<vmem>>, vector<32x256xf32>
    %c0_1 = arith.constant 0 : index
    %c0_2 = arith.constant 0 : index
    %1 = vector.load %arg2[%c0_1, %c0_2] : memref<32x32xf32, #tpu.memory_space<vmem>>, vector<32x32xf32>
    %cst = arith.constant dense<0.000000e+00> : vector<32x256xf32>
    %2 = tpu.matmul %1, %0, %cst {dimension_numbers = #tpu.dot_dimension_numbers<[1], [0], [0], [1], [0, 0, 1, 1], [], []>} : vector<32x32xf32>, vector<32x256xf32>, vector<32x256xf32> -> vector<32x256xf32>
    %c0_3 = arith.constant 0 : index
    %c0_4 = arith.constant 0 : index
    %3 = vector.load %arg3[%c0_3, %c0_4] : memref<32x1xf32, #tpu.memory_space<vmem>>, vector<32x1xf32>
    %4 = vector.broadcast %3 : vector<32x1xf32> to vector<32x256xf32>
    %5 = arith.addf %2, %4 : vector<32x256xf32>
    %6 = math.tanh %5 : vector<32x256xf32>
    %c0_5 = arith.constant 0 : index
    %c0_6 = arith.constant 0 : index
    %7 = vector.load %arg4[%c0_5, %c0_6] : memref<32x1xf32, #tpu.memory_space<vmem>>, vector<32x1xf32>
    %8 = vector.broadcast %7 : vector<32x1xf32> to vector<32x256xf32>
    %9 = arith.mulf %6, %8 : vector<32x256xf32>
    %cst_7 = arith.constant dense<0.000000e+00> : vector<256xf32>
    %10 = vector.multi_reduction <add>, %9, %cst_7 [0] : vector<32x256xf32> to vector<256xf32>
    %11 = vector.shape_cast %10 : vector<256xf32> to vector<1x256xf32>
    %12 = vector.extract_strided_slice %11 {offsets = [0, 0], sizes = [1, 128], strides = [1, 1]} : vector<1x256xf32> to vector<1x128xf32>
    %13 = vector.extract_strided_slice %11 {offsets = [0, 128], sizes = [1, 128], strides = [1, 1]} : vector<1x256xf32> to vector<1x128xf32>
    %14 = arith.subf %12, %13 : vector<1x128xf32>
    %15 = arith.negf %14 : vector<1x128xf32>
    %16 = math.exp %15 : vector<1x128xf32>
    %cst_8 = arith.constant 1.000000e+00 : f32
    %17 = vector.broadcast %cst_8 : f32 to vector<1x128xf32>
    %18 = arith.addf %17, %16 : vector<1x128xf32>
    %19 = arith.divf %17, %18 : vector<1x128xf32>
    %cst_9 = arith.constant 1.000000e+00 : f32
    %20 = vector.broadcast %cst_9 : f32 to vector<1x128xf32>
    %21 = arith.subf %20, %19 : vector<1x128xf32>
    %22 = vector.extract_strided_slice %0 {offsets = [0, 0], sizes = [32, 128], strides = [1, 1]} : vector<32x256xf32> to vector<32x128xf32>
    %23 = vector.broadcast %19 : vector<1x128xf32> to vector<32x128xf32>
    %24 = arith.mulf %23, %22 : vector<32x128xf32>
    %25 = vector.extract_strided_slice %0 {offsets = [0, 128], sizes = [32, 128], strides = [1, 1]} : vector<32x256xf32> to vector<32x128xf32>
    %26 = vector.broadcast %21 : vector<1x128xf32> to vector<32x128xf32>
    %27 = arith.mulf %26, %25 : vector<32x128xf32>
    %28 = arith.addf %24, %27 : vector<32x128xf32>
    %c0_10 = arith.constant 0 : index
    %c0_11 = arith.constant 0 : index
    %29 = vector.load %arg5[%c0_10, %c0_11] : memref<32x32xf32, #tpu.memory_space<vmem>>, vector<32x32xf32>
    %cst_12 = arith.constant dense<0.000000e+00> : vector<32x128xf32>
    %30 = tpu.matmul %29, %28, %cst_12 {dimension_numbers = #tpu.dot_dimension_numbers<[1], [0], [0], [1], [0, 0, 1, 1], [], []>} : vector<32x32xf32>, vector<32x128xf32>, vector<32x128xf32> -> vector<32x128xf32>
    %c0_13 = arith.constant 0 : index
    %c0_14 = arith.constant 0 : index
    %31 = vector.load %arg6[%c0_13, %c0_14] : memref<32x1xf32, #tpu.memory_space<vmem>>, vector<32x1xf32>
    %32 = vector.broadcast %31 : vector<32x1xf32> to vector<32x128xf32>
    %33 = arith.addf %30, %32 : vector<32x128xf32>
    %cst_15 = arith.constant 5.000000e-01 : f32
    %34 = vector.broadcast %cst_15 : f32 to vector<32x128xf32>
    %35 = arith.mulf %34, %33 : vector<32x128xf32>
    %cst_16 = arith.constant 0.707106769 : f32
    %36 = vector.broadcast %cst_16 : f32 to vector<32x128xf32>
    %37 = arith.mulf %33, %36 : vector<32x128xf32>
    %38 = math.erf %37 : vector<32x128xf32>
    %cst_17 = arith.constant 1.000000e+00 : f32
    %39 = vector.broadcast %cst_17 : f32 to vector<32x128xf32>
    %40 = arith.addf %39, %38 : vector<32x128xf32>
    %41 = arith.mulf %35, %40 : vector<32x128xf32>
    %c0_18 = arith.constant 0 : index
    %c0_19 = arith.constant 0 : index
    %42 = vector.load %arg7[%c0_18, %c0_19] : memref<32x1xf32, #tpu.memory_space<vmem>>, vector<32x1xf32>
    %43 = vector.broadcast %42 : vector<32x1xf32> to vector<32x128xf32>
    %44 = arith.mulf %41, %43 : vector<32x128xf32>
    %cst_20 = arith.constant dense<0.000000e+00> : vector<128xf32>
    %45 = vector.multi_reduction <add>, %44, %cst_20 [0] : vector<32x128xf32> to vector<128xf32>
    %46 = vector.shape_cast %45 : vector<128xf32> to vector<1x128xf32>
    %c0_21 = arith.constant 0 : index
    %c0_22 = arith.constant 0 : index
    %47 = vector.load %arg8[%c0_21, %c0_22] : memref<1x1xf32, #tpu.memory_space<vmem>>, vector<1x1xf32>
    %48 = vector.broadcast %47 : vector<1x1xf32> to vector<1x128xf32>
    %49 = arith.addf %46, %48 : vector<1x128xf32>
    %c0_23 = arith.constant 0 : index
    %c0_24 = arith.constant 0 : index
    %50 = vector.load %arg9[%c0_23, %c0_24] : memref<1x128xf32, #tpu.memory_space<vmem>>, vector<1x128xf32>
    tpu.vector_store %arg9[%c0_23, %c0_24], %49 {strides = array<i32>} : memref<1x128xf32, #tpu.memory_space<vmem>>, vector<1x128xf32>,
    return
  }
  func.func @transform_0(%arg0: i32) -> (i32, i32) {
    %c0_i32 = arith.constant 0 : i32
    %c0_i32_0 = arith.constant 0 : i32
    return %c0_i32, %arg0 : i32, i32
  }
  func.func @transform_1(%arg0: i32) -> (i32, i32) {
    %c0_i32 = arith.constant 0 : i32
    %c0_i32_0 = arith.constant 0 : i32
    %c0_i32_1 = arith.constant 0 : i32
    return %c0_i32, %c0_i32_0 : i32, i32
  }
  func.func @transform_2(%arg0: i32) -> (i32, i32) {
    %c0_i32 = arith.constant 0 : i32
    %c0_i32_0 = arith.constant 0 : i32
    %c0_i32_1 = arith.constant 0 : i32
    return %c0_i32, %c0_i32_0 : i32, i32
  }
  func.func @transform_3(%arg0: i32) -> (i32, i32) {
    %c0_i32 = arith.constant 0 : i32
    %c0_i32_0 = arith.constant 0 : i32
    %c0_i32_1 = arith.constant 0 : i32
    return %c0_i32, %c0_i32_0 : i32, i32
  }
  func.func @transform_4(%arg0: i32) -> (i32, i32) {
    %c0_i32 = arith.constant 0 : i32
    %c0_i32_0 = arith.constant 0 : i32
    %c0_i32_1 = arith.constant 0 : i32
    return %c0_i32, %c0_i32_0 : i32, i32
  }
  func.func @transform_5(%arg0: i32) -> (i32, i32) {
    %c0_i32 = arith.constant 0 : i32
    %c0_i32_0 = arith.constant 0 : i32
    %c0_i32_1 = arith.constant 0 : i32
    return %c0_i32, %c0_i32_0 : i32, i32
  }
  func.func @transform_6(%arg0: i32) -> (i32, i32) {
    %c0_i32 = arith.constant 0 : i32
    %c0_i32_0 = arith.constant 0 : i32
    %c0_i32_1 = arith.constant 0 : i32
    return %c0_i32, %c0_i32_0 : i32, i32
  }
  func.func @transform_7(%arg0: i32) -> (i32, i32) {
    %c0_i32 = arith.constant 0 : i32
    %c0_i32_0 = arith.constant 0 : i32
    %c0_i32_1 = arith.constant 0 : i32
    return %c0_i32, %c0_i32_0 : i32, i32
  }
  func.func @transform_8(%arg0: i32) -> (i32, i32) {
    %c0_i32 = arith.constant 0 : i32
    %c0_i32_0 = arith.constant 0 : i32
    return %c0_i32, %arg0 : i32, i32
  }
}

</mosaic_0001>

<llo_original>
// kernel: commercial_activeness_head.1
$region0: #{commercial_activeness_head.1}
  #allocation0 [shape = 'u32[]', space=smem, size = 0x4, offset = 0x4, fixed_abs, tag = 'smem constant byte address 0x4 - core index']
  #allocation1 [shape = 'u32[144,128]{1,0:T(1,128)}', space=vmem, size = 0x12000, scoped, tag = 'internal scratch']
  #allocation2 [shape = 'f32[1,1]{1,0:T(1,128)S(1)}', space=vmem, size = 0x200, scoped, tag = 'scoped memory for commercial_activeness_head.1']
  %s0 = inlined_call_operand.vmem [shape: f32[32,256], index: 0, kind: input, shape index: {}]
  %s1 = inlined_call_operand.vmem [shape: f32[32,32], index: 1, kind: input, shape index: {}]
  %s2 = inlined_call_operand.vmem [shape: f32[32,1], index: 2, kind: input, shape index: {}]
  %s3 = inlined_call_operand.vmem [shape: f32[32,1], index: 3, kind: input, shape index: {}]
  %s4 = inlined_call_operand.vmem [shape: f32[32,32], index: 4, kind: input, shape index: {}]
  %s5 = inlined_call_operand.vmem [shape: f32[32,1], index: 5, kind: input, shape index: {}]
  %s6 = inlined_call_operand.vmem [shape: f32[32,1], index: 6, kind: input, shape index: {}]
  %s7 = inlined_call_operand.<no memory space> [shape: f32[1,1], index: 7, kind: input, shape index: {}]
  %s8 = inlined_call_operand.vmem [shape: f32[1,128], index: 8, kind: output, shape index: {}]
  %s9 = sld [smem:[#allocation0]]
  $region42: #{commercial_activeness_head.1} parent=0
    _
  %s11 = ssub.s32 1, %s9
  %s12 = scalar_select 0, %s11, %s9
  %v13 = vstv %s7
  %14 = vst [vmem:[#allocation2] sm:$0x1] %v13
  // Predicated region
  $region2: #{commercial_activeness_head.1} parent=0 // pred_check
    _
  $region3: #{commercial_activeness_head.1} parent=0 // pred_check_branch
    %16 = sbr.rel (0) target = $region5
  $region4: #{commercial_activeness_head.1} parent=0 // pred_region
    _
  $region5: #{commercial_activeness_head.1} parent=0 // pred_fallthru
    _
  // Predicated region
  $region6: #{commercial_activeness_head.1} parent=0 // pred_check
    _
  $region7: #{commercial_activeness_head.1} parent=0 // pred_check_branch
    %18 = sbr.rel (0) target = $region9
  $region8: #{commercial_activeness_head.1} parent=0 // pred_region
    _
  $region9: #{commercial_activeness_head.1} parent=0 // pred_fallthru
    _
  // Predicated region
  $region10: #{commercial_activeness_head.1} parent=0 // pred_check
    _
  $region11: #{commercial_activeness_head.1} parent=0 // pred_check_branch
    %20 = sbr.rel (0) target = $region13
  $region12: #{commercial_activeness_head.1} parent=0 // pred_region
    _
  $region13: #{commercial_activeness_head.1} parent=0 // pred_fallthru
    _
  // Predicated region
  $region14: #{commercial_activeness_head.1} parent=0 // pred_check
    _
  $region15: #{commercial_activeness_head.1} parent=0 // pred_check_branch
    %22 = sbr.rel (0) target = $region17
  $region16: #{commercial_activeness_head.1} parent=0 // pred_region
    _
  $region17: #{commercial_activeness_head.1} parent=0 // pred_fallthru
    _
  // Predicated region
  $region18: #{commercial_activeness_head.1} parent=0 // pred_check
    _
  $region19: #{commercial_activeness_head.1} parent=0 // pred_check_branch
    %24 = sbr.rel (0) target = $region21
  $region20: #{commercial_activeness_head.1} parent=0 // pred_region
    _
  $region21: #{commercial_activeness_head.1} parent=0 // pred_fallthru
    _
  // Predicated region
  $region22: #{commercial_activeness_head.1} parent=0 // pred_check
    _
  $region23: #{commercial_activeness_head.1} parent=0 // pred_check_branch
    %26 = sbr.rel (0) target = $region25
  $region24: #{commercial_activeness_head.1} parent=0 // pred_region
    _
  $region25: #{commercial_activeness_head.1} parent=0 // pred_fallthru
    _
  // Predicated region
  $region26: #{commercial_activeness_head.1} parent=0 // pred_check
    _
  $region27: #{commercial_activeness_head.1} parent=0 // pred_check_branch
    %28 = sbr.rel (0) target = $region29
  $region28: #{commercial_activeness_head.1} parent=0 // pred_region
    _
  $region29: #{commercial_activeness_head.1} parent=0 // pred_fallthru
    _
  // Predicated region
  $region30: #{commercial_activeness_head.1} parent=0 // pred_check
    _
  $region31: #{commercial_activeness_head.1} parent=0 // pred_check_branch
    %30 = sbr.rel (0) target = $region33
  $region32: #{commercial_activeness_head.1} parent=0 // pred_region
    _
  $region33: #{commercial_activeness_head.1} parent=0 // pred_fallthru
    _
  %v31 = vld [vmem:[%s0] sm:$0xff]
  %v32 = vld [vmem:[%s0 + $0x8] sm:$0xff]
  %v33 = vld [vmem:[%s0 + $0x10] sm:$0xff]
  %v34 = vld [vmem:[%s0 + $0x18] sm:$0xff]
  %v35 = vld [vmem:[%s0 + $0x20] sm:$0xff]
  %v36 = vld [vmem:[%s0 + $0x28] sm:$0xff]
  %v37 = vld [vmem:[%s0 + $0x30] sm:$0xff]
  %v38 = vld [vmem:[%s0 + $0x38] sm:$0xff]
  %v39 = vld [vmem:[%s1] sm:$0xff]
  %v40 = vld [vmem:[%s1 + $0x8] sm:$0xff]
  %v41 = vld [vmem:[%s1 + $0x10] sm:$0xff]
  %v42 = vld [vmem:[%s1 + $0x18] sm:$0xff]
  %v43 = vld [vmem:[%s2] sm:$0xff]
  %v44 = vld [vmem:[%s2 + $0x8] sm:$0xff]
  %v45 = vld [vmem:[%s2 + $0x10] sm:$0xff]
  %v46 = vld [vmem:[%s2 + $0x18] sm:$0xff]
  %48 = vset.pattern.permute.xlu0 0
  %49 = vperm.xlu0 %48, %v43
  %v50 = vpop.permute.xlu0 %49
  %53 = vset.pattern.permute.xlu0 0
  %54 = vperm.xlu0 %53, %v44
  %v55 = vpop.permute.xlu0 %54
  %58 = vset.pattern.permute.xlu0 0
  %59 = vperm.xlu0 %58, %v45
  %v60 = vpop.permute.xlu0 %59
  %63 = vset.pattern.permute.xlu0 0
  %64 = vperm.xlu0 %63, %v46
  %v65 = vpop.permute.xlu0 %64
  %vm67 = vcmask 261120
  %v69 = vsel %vm67, %v39, 0
  %v72 = vsel %vm67, %v40, 0
  %v75 = vsel %vm67, %v41, 0
  %v78 = vsel %vm67, %v42, 0
  %80 = vmatprep.subr.mxu0 %v32
  %81 = vmatpush1.msra.mxu0 %v31
  %82 = vmatprep.subr.mxu0 %v34
  %83 = vmatpush1.msra.mxu0 %v33
  %84 = vmatprep.subr.mxu0 %v36
  %85 = vmatpush1.msra.mxu0 %v35
  %86 = vmatprep.subr.mxu0 %v38
  %87 = vmatpush1.msra.mxu0 %v37
  %88 = vmatprep.subr.mxu0 0.0
  %89 = vmatpush1.msra.mxu0 0.0
  %90 = vmatprep.subr.mxu0 0.0
  %91 = vmatpush1.msra.mxu0 0.0
  %92 = vmatprep.subr.mxu0 0.0
  %93 = vmatpush1.msra.mxu0 0.0
  %94 = vmatprep.subr.mxu0 0.0
  %95 = vmatpush1.msra.mxu0 0.0
  %96 = vmatprep.subr.mxu0 0.0
  %97 = vmatpush1.msra.mxu0 0.0
  %98 = vmatprep.subr.mxu0 0.0
  %99 = vmatpush1.msra.mxu0 0.0
  %100 = vmatprep.subr.mxu0 0.0
  %101 = vmatpush1.msra.mxu0 0.0
  %102 = vmatprep.subr.mxu0 0.0
  %103 = vmatpush1.msra.mxu0 0.0
  %104 = vmatprep.subr.mxu0 0.0
  %105 = vmatpush1.msra.mxu0 0.0
  %106 = vmatprep.subr.mxu0 0.0
  %107 = vmatpush1.msra.mxu0 0.0
  %108 = vmatprep.subr.mxu0 0.0
  %109 = vmatpush1.msra.mxu0 0.0
  %110 = vmatprep.subr.mxu0 0.0
  %111 = vmatpush1.msra.mxu0 0.0
  %112 = vmatprep.subr.mxu0 0.0
  %113 = vmatpush1.msra.mxu0 0.0
  %114 = vmatprep.subr.mxu0 0.0
  %115 = vmatpush1.msra.mxu0 0.0
  %116 = vmatprep.subr.mxu0 0.0
  %117 = vmatpush1.msra.mxu0 0.0
  %118 = vmatprep.subr.mxu0 0.0
  %119 = vmatpush1.msra.mxu0 0.0
  %120 = vmatprep.subr.mxu0 0.0
  %121 = vmatpush1.msra.mxu0 0.0
  %122 = vmatprep.subr.mxu0 0.0
  %123 = vmatpush1.msra.mxu0 0.0
  %124 = vmatprep.subr.mxu0 0.0
  %125 = vmatpush1.msra.mxu0 0.0
  %126 = vmatprep.subr.mxu0 0.0
  %127 = vmatpush1.msra.mxu0 0.0
  %128 = vmatprep.subr.mxu0 0.0
  %129 = vmatpush1.msra.mxu0 0.0
  %130 = vmatprep.subr.mxu0 0.0
  %131 = vmatpush1.msra.mxu0 0.0
  %132 = vmatprep.subr.mxu0 0.0
  %133 = vmatpush1.msra.mxu0 0.0
  %134 = vmatprep.subr.mxu0 0.0
  %135 = vmatpush1.msra.mxu0 0.0
  %136 = vmatprep.subr.mxu0 0.0
  %137 = vmatpush1.msra.mxu0 0.0
  %138 = vmatprep.subr.mxu0 0.0
  %139 = vmatpush1.msra.mxu0 0.0
  %140 = vmatprep.subr.mxu0 0.0
  %141 = vmatpush1.msra.mxu0 0.0
  %142 = vmatprep.subr.mxu0 0.0
  %143 = vmatpush1.msra.mxu0 0.0
  %144 = vmatprep.mubr.f32.mxu0 0.0
  %145 = vmatmul.mubr.f32.gmra.mrb[0].mxu0 %v69
  %v146 = vpop.f32.mrb[0].mxu0
  %v147 = vadd.f32 %v50, %v146
  %v148 = vpop.f32.mrb[0].mxu0
  %v149 = vadd.f32 %v50, %v148
  %150 = vmatprep.mubr.f32.mxu0 0.0
  %151 = vmatmul.mubr.f32.gmra.mrb[0].mxu0 %v72
  %v152 = vpop.f32.mrb[0].mxu0
  %v153 = vadd.f32 %v55, %v152
  %v154 = vpop.f32.mrb[0].mxu0
  %v155 = vadd.f32 %v55, %v154
  %156 = vmatprep.mubr.f32.mxu0 0.0
  %157 = vmatmul.mubr.f32.gmra.mrb[0].mxu0 %v75
  %v158 = vpop.f32.mrb[0].mxu0
  %v159 = vadd.f32 %v60, %v158
  %v160 = vpop.f32.mrb[0].mxu0
  %v161 = vadd.f32 %v60, %v160
  %162 = vmatprep.mubr.f32.mxu0 0.0
  %163 = vmatmul.mubr.f32.gmra.mrb[0].mxu0 %v78
  %v164 = vpop.f32.mrb[0].mxu0
  %v165 = vadd.f32 %v65, %v164
  %v166 = vpop.f32.mrb[0].mxu0
  %v167 = vadd.f32 %v65, %v166
  %168 = vdwg.mxu0
  %v169 = vtanh.pop %v147
  %v170 = vtanh.pop %v149
  %v171 = vtanh.pop %v153
  %v172 = vtanh.pop %v155
  %v173 = vtanh.pop %v159
  %v174 = vtanh.pop %v161
  %v175 = vtanh.pop %v165
  %v176 = vtanh.pop %v167
  %v177 = vld [vmem:[%s3] sm:$0xff]
  %v178 = vld [vmem:[%s3 + $0x8] sm:$0xff]
  %v179 = vld [vmem:[%s3 + $0x10] sm:$0xff]
  %v180 = vld [vmem:[%s3 + $0x18] sm:$0xff]
  %182 = vset.pattern.permute.xlu0 0
  %183 = vperm.xlu0 %182, %v177
  %v184 = vpop.permute.xlu0 %183
  %187 = vset.pattern.permute.xlu0 0
  %188 = vperm.xlu0 %187, %v178
  %v189 = vpop.permute.xlu0 %188
  %192 = vset.pattern.permute.xlu0 0
  %193 = vperm.xlu0 %192, %v179
  %v194 = vpop.permute.xlu0 %193
  %197 = vset.pattern.permute.xlu0 0
  %198 = vperm.xlu0 %197, %v180
  %v199 = vpop.permute.xlu0 %198
  %v201 = vmul.f32 %v169, %v184
  %v202 = vmul.f32 %v170, %v184
  %v203 = vmul.f32 %v171, %v189
  %v204 = vmul.f32 %v172, %v189
  %v205 = vmul.f32 %v173, %v194
  %v206 = vmul.f32 %v174, %v194
  %v207 = vmul.f32 %v175, %v199
  %v208 = vmul.f32 %v176, %v199
  %v209 = vadd.f32 %v201, %v203
  %v210 = vadd.f32 %v209, %v205
  %v211 = vadd.f32 %v210, %v207
  %v212 = vrot.slane %v211, 4
  %v213 = vadd.f32 %v211, %v212
  %v214 = vrot.slane %v213, 2
  %v215 = vadd.f32 %v213, %v214
  %v216 = vrot.slane %v215, 1
  %v217 = vadd.f32 %v215, %v216
  %v218 = vadd.f32 %v202, %v204
  %v219 = vadd.f32 %v218, %v206
  %v220 = vadd.f32 %v219, %v208
  %v221 = vrot.slane %v220, 4
  %v222 = vadd.f32 %v220, %v221
  %v223 = vrot.slane %v222, 2
  %v224 = vadd.f32 %v222, %v223
  %v225 = vrot.slane %v224, 1
  %v226 = vadd.f32 %v224, %v225
  %v227 = vsub.f32 %v217, %v226
  %v228 = vxor.u32 %v227, 2147483648
  %v229 = vmul.f32 %v228, 1.442695
  %v230 = vpow.pop %v229
  %v231 = vadd.f32 %v230, 1.0
  %v232 = vrcp.pop %v231
  %v233 = vmul.f32 1.0, %v232
  %v234 = vsub.f32 1.0, %v233
  %v235 = vmul.f32 %v233, %v31
  %v236 = vmul.f32 %v233, %v33
  %v237 = vmul.f32 %v233, %v35
  %v238 = vmul.f32 %v233, %v37
  %v239 = vmul.f32 %v234, %v32
  %v240 = vmul.f32 %v234, %v34
  %v241 = vmul.f32 %v234, %v36
  %v242 = vmul.f32 %v234, %v38
  %v243 = vadd.f32 %v235, %v239
  %v244 = vadd.f32 %v236, %v240
  %v245 = vadd.f32 %v237, %v241
  %v246 = vadd.f32 %v238, %v242
  %v247 = vld [vmem:[%s4] sm:$0xff]
  %v248 = vld [vmem:[%s4 + $0x8] sm:$0xff]
  %v249 = vld [vmem:[%s4 + $0x10] sm:$0xff]
  %v250 = vld [vmem:[%s4 + $0x18] sm:$0xff]
  %v251 = vld [vmem:[%s5] sm:$0xff]
  %v252 = vld [vmem:[%s5 + $0x8] sm:$0xff]
  %v253 = vld [vmem:[%s5 + $0x10] sm:$0xff]
  %v254 = vld [vmem:[%s5 + $0x18] sm:$0xff]
  %256 = vset.pattern.permute.xlu0 0
  %257 = vperm.xlu0 %256, %v251
  %v258 = vpop.permute.xlu0 %257
  %261 = vset.pattern.permute.xlu0 0
  %262 = vperm.xlu0 %261, %v252
  %v263 = vpop.permute.xlu0 %262
  %266 = vset.pattern.permute.xlu0 0
  %267 = vperm.xlu0 %266, %v253
  %v268 = vpop.permute.xlu0 %267
  %271 = vset.pattern.permute.xlu0 0
  %272 = vperm.xlu0 %271, %v254
  %v273 = vpop.permute.xlu0 %272
  %v276 = vsel %vm67, %v247, 0
  %v279 = vsel %vm67, %v248, 0
  %v282 = vsel %vm67, %v249, 0
  %v285 = vsel %vm67, %v250, 0
  %287 = vmatprep.subr.mxu0 0.0
  %288 = vmatpush1.msra.mxu0 %v243
  %289 = vmatprep.subr.mxu0 0.0
  %290 = vmatpush1.msra.mxu0 %v244
  %291 = vmatprep.subr.mxu0 0.0
  %292 = vmatpush1.msra.mxu0 %v245
  %293 = vmatprep.subr.mxu0 0.0
  %294 = vmatpush1.msra.mxu0 %v246
  %295 = vmatprep.subr.mxu0 0.0
  %296 = vmatpush1.msra.mxu0 0.0
  %297 = vmatprep.subr.mxu0 0.0
  %298 = vmatpush1.msra.mxu0 0.0
  %299 = vmatprep.subr.mxu0 0.0
  %300 = vmatpush1.msra.mxu0 0.0
  %301 = vmatprep.subr.mxu0 0.0
  %302 = vmatpush1.msra.mxu0 0.0
  %303 = vmatprep.subr.mxu0 0.0
  %304 = vmatpush1.msra.mxu0 0.0
  %305 = vmatprep.subr.mxu0 0.0
  %306 = vmatpush1.msra.mxu0 0.0
  %307 = vmatprep.subr.mxu0 0.0
  %308 = vmatpush1.msra.mxu0 0.0
  %309 = vmatprep.subr.mxu0 0.0
  %310 = vmatpush1.msra.mxu0 0.0
  %311 = vmatprep.subr.mxu0 0.0
  %312 = vmatpush1.msra.mxu0 0.0
  %313 = vmatprep.subr.mxu0 0.0
  %314 = vmatpush1.msra.mxu0 0.0
  %315 = vmatprep.subr.mxu0 0.0
  %316 = vmatpush1.msra.mxu0 0.0
  %317 = vmatprep.subr.mxu0 0.0
  %318 = vmatpush1.msra.mxu0 0.0
  %319 = vmatprep.subr.mxu0 0.0
  %320 = vmatpush1.msra.mxu0 0.0
  %321 = vmatprep.subr.mxu0 0.0
  %322 = vmatpush1.msra.mxu0 0.0
  %323 = vmatprep.subr.mxu0 0.0
  %324 = vmatpush1.msra.mxu0 0.0
  %325 = vmatprep.subr.mxu0 0.0
  %326 = vmatpush1.msra.mxu0 0.0
  %327 = vmatprep.subr.mxu0 0.0
  %328 = vmatpush1.msra.mxu0 0.0
  %329 = vmatprep.subr.mxu0 0.0
  %330 = vmatpush1.msra.mxu0 0.0
  %331 = vmatprep.subr.mxu0 0.0
  %332 = vmatpush1.msra.mxu0 0.0
  %333 = vmatprep.subr.mxu0 0.0
  %334 = vmatpush1.msra.mxu0 0.0
  %335 = vmatprep.subr.mxu0 0.0
  %336 = vmatpush1.msra.mxu0 0.0
  %337 = vmatprep.subr.mxu0 0.0
  %338 = vmatpush1.msra.mxu0 0.0
  %339 = vmatprep.subr.mxu0 0.0
  %340 = vmatpush1.msra.mxu0 0.0
  %341 = vmatprep.subr.mxu0 0.0
  %342 = vmatpush1.msra.mxu0 0.0
  %343 = vmatprep.subr.mxu0 0.0
  %344 = vmatpush1.msra.mxu0 0.0
  %345 = vmatprep.subr.mxu0 0.0
  %346 = vmatpush1.msra.mxu0 0.0
  %347 = vmatprep.subr.mxu0 0.0
  %348 = vmatpush1.msra.mxu0 0.0
  %349 = vmatprep.subr.mxu0 0.0
  %350 = vmatpush1.msra.mxu0 0.0
  %351 = vmatprep.mubr.f32.mxu0 0.0
  %352 = vmatmul.mubr.f32.gmra.mrb[0].mxu0 %v276
  %v353 = vpop.f32.mrb[0].mxu0
  %v354 = vadd.f32 %v258, %v353
  %v355 = vpop.f32.mrb[0].mxu0
  %356 = vmatprep.mubr.f32.mxu0 0.0
  %357 = vmatmul.mubr.f32.gmra.mrb[0].mxu0 %v279
  %v358 = vpop.f32.mrb[0].mxu0
  %v359 = vadd.f32 %v263, %v358
  %v360 = vpop.f32.mrb[0].mxu0
  %361 = vmatprep.mubr.f32.mxu0 0.0
  %362 = vmatmul.mubr.f32.gmra.mrb[0].mxu0 %v282
  %v363 = vpop.f32.mrb[0].mxu0
  %v364 = vadd.f32 %v268, %v363
  %v365 = vpop.f32.mrb[0].mxu0
  %366 = vmatprep.mubr.f32.mxu0 0.0
  %367 = vmatmul.mubr.f32.gmra.mrb[0].mxu0 %v285
  %v368 = vpop.f32.mrb[0].mxu0
  %v369 = vadd.f32 %v273, %v368
  %v370 = vpop.f32.mrb[0].mxu0
  %371 = vdwg.mxu0
  %v372 = vmul.f32 %v354, 0.5
  %v373 = vmul.f32 %v359, 0.5
  %v374 = vmul.f32 %v364, 0.5
  %v375 = vmul.f32 %v369, 0.5
  %v376 = vmul.f32 %v354, 0.70710677
  %v377 = vmul.f32 %v359, 0.70710677
  %v378 = vmul.f32 %v364, 0.70710677
  %v379 = vmul.f32 %v369, 0.70710677
  %v380 = verf.f32.pop %v376
  %v381 = verf.f32.pop %v377
  %v382 = verf.f32.pop %v378
  %v383 = verf.f32.pop %v379
  %v384 = vadd.f32 %v380, 1.0
  %v385 = vadd.f32 %v381, 1.0
  %v386 = vadd.f32 %v382, 1.0
  %v387 = vadd.f32 %v383, 1.0
  %v388 = vmul.f32 %v372, %v384
  %v389 = vmul.f32 %v373, %v385
  %v390 = vmul.f32 %v374, %v386
  %v391 = vmul.f32 %v375, %v387
  %v392 = vld [vmem:[%s6] sm:$0xff]
  %v393 = vld [vmem:[%s6 + $0x8] sm:$0xff]
  %v394 = vld [vmem:[%s6 + $0x10] sm:$0xff]
  %v395 = vld [vmem:[%s6 + $0x18] sm:$0xff]
  %397 = vset.pattern.permute.xlu0 0
  %398 = vperm.xlu0 %397, %v392
  %v399 = vpop.permute.xlu0 %398
  %402 = vset.pattern.permute.xlu0 0
  %403 = vperm.xlu0 %402, %v393
  %v404 = vpop.permute.xlu0 %403
  %407 = vset.pattern.permute.xlu0 0
  %408 = vperm.xlu0 %407, %v394
  %v409 = vpop.permute.xlu0 %408
  %412 = vset.pattern.permute.xlu0 0
  %413 = vperm.xlu0 %412, %v395
  %v414 = vpop.permute.xlu0 %413
  %v416 = vmul.f32 %v388, %v399
  %v417 = vmul.f32 %v389, %v404
  %v418 = vmul.f32 %v390, %v409
  %v419 = vmul.f32 %v391, %v414
  %v420 = vadd.f32 %v416, %v417
  %v421 = vadd.f32 %v420, %v418
  %v422 = vadd.f32 %v421, %v419
  %v423 = vrot.slane %v422, 4
  %v424 = vadd.f32 %v422, %v423
  %v425 = vrot.slane %v424, 2
  %v426 = vadd.f32 %v424, %v425
  %v427 = vrot.slane %v426, 1
  %v428 = vadd.f32 %v426, %v427
  %v429 = vld [vmem:[#allocation2] sm:$0x1]
  %431 = vset.pattern.permute.xlu0 0
  %432 = vperm.xlu0 %431, %v429
  %v433 = vpop.permute.xlu0 %432
  %v435 = vlaneseq
  %v436 = vshrl.u32 %v435, 7
  %v437 = vsub.s32 0, %v436
  %v438 = vrot.slane %v433, %v437
  %v439 = vadd.f32 %v428, %v438
  %440 = vst [vmem:[%s8] sm:$0x1] %v439
  // Predicated region
  $region34: #{commercial_activeness_head.1} parent=0 // pred_check
    _
  $region35: #{commercial_activeness_head.1} parent=0 // pred_check_branch
    %442 = sbr.rel (0) target = $region37
  $region36: #{commercial_activeness_head.1} parent=0 // pred_region
    _
  $region37: #{commercial_activeness_head.1} parent=0 // pred_fallthru
    _
  // Predicated region
  $region38: #{commercial_activeness_head.1} parent=0 // pred_check
    _
  $region39: #{commercial_activeness_head.1} parent=0 // pred_check_branch
    %444 = sbr.rel (0) target = $region41
  $region40: #{commercial_activeness_head.1} parent=0 // pred_region
    _
  $region41: #{commercial_activeness_head.1} parent=0 // pred_fallthru
    _

</llo_original>
